<compile_context>
chip_gen: v5e
topology: v5e:2x2
jax: 0.10.0
libtpu: 0.0.40
codegen_flags: <defaults>
</compile_context>

<pallas_src>
import functools

import jax
import jax.numpy as jnp
import numpy as np
from jax import lax
from jax.experimental import pallas as pl
from jax.experimental.pallas import tpu as pltpu

_LANES = 128


def _tversky_stats_kernel(x_ref, t_ref, o_ref, *, classes_per_blk, n_par,
                          tile_rows, rows_valid, ragged, part_rows):
    """Grid: (N, n_par, spatial_tiles) -- spatial is the innermost (reduction) axis.

    x_ref: (1, classes_per_blk, tile_rows, 128)   probabilities (native dtype)
    t_ref: (1, tile_rows, 128)                    int8/int32 class labels
    o_ref: (1, classes_per_blk*3, part_rows, 128) f32 partial sums [tp, sum(pred), sum(tgt)]
                                                  per class; resident across the spatial axis.
    """
    s = pl.program_id(2)

    @pl.when(s == 0)
    def _():
        o_ref[...] = jnp.zeros_like(o_ref)

    t = t_ref[0].astype(jnp.int32)                        # (tile_rows, 128)
    if ragged:
        # Last spatial tile overhangs the un-padded array: mask rows >= rows_valid.
        row = lax.broadcasted_iota(jnp.int32, (tile_rows, _LANES), 0) + s * tile_rows
        valid = row < rows_valid
        t = jnp.where(valid, t, -1)                       # fold target mask in once per tile

    class_off = pl.program_id(1) * classes_per_blk        # global class offset of this block

    def _fold(v):                                         # (tile_rows,128) -> (part_rows,128)
        if part_rows == 8:
            # Pure VALU vreg adds (sublane-tile split is layout-free); no XLU, no masked store.
            return jnp.sum(v.reshape(tile_rows // 8, 8, _LANES), axis=0)
        return jnp.sum(v, axis=0, keepdims=True)          # tiny-input fallback

    def one_class(j):
        p = x_ref[0, j]                                   # (tile_rows, 128) native float
        # argmax over cat((1-p, p), dim=1): predicted 1 iff p > 0.5 (tie -> 0)
        lbl = p > 0.5
        if ragged:
            lbl = jnp.logical_and(lbl, valid)
        lbl = lbl.astype(jnp.float32)
        # TODO(synk): for bf16 inputs, bf16 mask math with per-vreg partial accumulation
        # would halve VALU work on v6e/v7x; kept in f32 here for exact counts.
        cls = j if n_par == 1 else class_off + j
        tgt = (t == cls).astype(jnp.float32)
        base = 3 * j
        o_ref[0, base + 0] = o_ref[0, base + 0] + _fold(lbl * tgt)   # tp
        o_ref[0, base + 1] = o_ref[0, base + 1] + _fold(lbl)         # sum(pred)
        o_ref[0, base + 2] = o_ref[0, base + 2] + _fold(tgt)         # sum(target)

    if classes_per_blk <= 16:
        for j in range(classes_per_blk):
            one_class(j)
    else:
        def body(j, carry):
            one_class(j)
            return carry
        lax.fori_loop(0, classes_per_blk, body, 0, unroll=4)


def multi_tversky_loss(inputs, targets, alpha=0.3, beta=0.7, gamma=2.0, weights=None,
                       block_bytes=8 * 1024 * 1024):
    """inputs: (N, C, H, W) float probabilities; targets: (N, H, W) integer class ids."""
    N, C, H, W = inputs.shape
    S = H * W

    # FocalBinaryTverskyLoss normalizes alpha/beta so they sum to 1.
    s_ab = alpha + beta
    if s_ab != 1.0:
        alpha, beta = alpha / s_ab, beta / s_ab
    eps = 1e-6

    if weights is None:
        w = jnp.full((C,), 1.0 / C, dtype=jnp.float32)
    else:
        w = jnp.asarray(weights, dtype=jnp.float32)
        assert w.shape == (C,), "number of classes should be equal to length of weights"

    # ---- static layout / tiling decisions -----------------------------------------------
    sr = -(-S // _LANES)                                  # spatial rows of 128 lanes
    # Megacore coverage for tiny batch (v7x): split classes across a 2nd parallel axis.
    n_par = 2 if (N == 1 and C >= 2 and C % 2 == 0) else 1
    cg = C // n_par                                       # classes per block

    row_bytes = cg * _LANES * inputs.dtype.itemsize
    tr = max(32, (block_bytes // row_bytes) // 32 * 32)   # rows per spatial tile (32-multiple)
    if tr >= sr:
        tr = sr                                           # one tile: "equal full dim" rule
        n_tiles = 1
        ragged = False
    else:
        n_tiles = -(-sr // tr)
        ragged = (sr % tr) != 0                           # last tile overhangs -> in-kernel mask
    part_rows = 8 if tr % 8 == 0 else 1                   # rows kept in each partial-sum tile

    # int8 targets cut target HBM traffic 4x; only when the (32,128) int8 tile applies.
    t_dtype = jnp.int8 if (C <= 127 and tr % 32 == 0) else jnp.int32

    x2 = inputs.reshape(N, C, S)                          # natural order, native dtype
    t2 = targets.reshape(N, S).astype(t_dtype)
    lane_pad = sr * _LANES - S
    if lane_pad:
        # TODO(synk): only the 128-lane remainder is padded (<=127 elems per row); a fully
        # pad-free path needs a class-on-sublane layout, which wastes sublanes for small C.
        x2 = jnp.pad(x2, ((0, 0), (0, 0), (0, lane_pad)))                  # p=0 -> pred 0
        t2 = jnp.pad(t2, ((0, 0), (0, lane_pad)), constant_values=-1)      # never a class
    x4 = x2.reshape(N, C, sr, _LANES)                     # free reshape (minor-dim split)
    t3 = t2.reshape(N, sr, _LANES)

    kernel = functools.partial(
        _tversky_stats_kernel, classes_per_blk=cg, n_par=n_par, tile_rows=tr,
        rows_valid=sr, ragged=ragged, part_rows=part_rows)

    x_blk = cg * tr * _LANES * inputs.dtype.itemsize
    t_blk = tr * _LANES * jnp.dtype(t_dtype).itemsize
    o_blk = cg * 3 * part_rows * _LANES * 4
    vmem_limit = int(min(max(2 * (x_blk + t_blk + o_blk) + (4 << 20), 16 << 20), 48 << 20))

    out_bytes = N * n_par * cg * 3 * part_rows * _LANES * 4
    cost = pl.CostEstimate(
        flops=int(8 * N * C * S),
        transcendentals=0,
        bytes_accessed=int(N * C * sr * _LANES * inputs.dtype.itemsize
                           + n_par * N * sr * _LANES * jnp.dtype(t_dtype).itemsize
                           + out_bytes))

    stats = pl.pallas_call(
        kernel,
        out_shape=jax.ShapeDtypeStruct((N, n_par * cg * 3, part_rows, _LANES), jnp.float32),
        grid=(N, n_par, n_tiles),
        in_specs=[
            pl.BlockSpec((1, cg, tr, _LANES), lambda n, g, s: (n, g, s, 0)),   # prob slab
            pl.BlockSpec((1, tr, _LANES), lambda n, g, s: (n, s, 0)),          # targets
        ],
        out_specs=pl.BlockSpec((1, cg * 3, part_rows, _LANES), lambda n, g, s: (n, g, 0, 0)),
        compiler_params=pltpu.CompilerParams(
            dimension_semantics=("parallel", "parallel", "arbitrary"),
            vmem_limit_bytes=vmem_limit),
        cost_estimate=cost,
    )(x4, t3)

    # ---- tiny finalization on N*C numbers in plain JAX -----------------------------------
    sums = stats.reshape(N, n_par * cg, 3, part_rows * _LANES).sum(axis=-1)[:, :C]
    tp = sums[..., 0]
    fp = sums[..., 1] - tp                                # sum(pred)   - tp
    fn = sums[..., 2] - tp                                # sum(target) - tp
    index = tp / (tp + alpha * fp + beta * fn + eps)
    one_minus = 1.0 - index
    if gamma == 2.0:
        focal = jnp.sqrt(one_minus)
    elif gamma == 1.0:
        focal = one_minus
    else:
        focal = jnp.power(one_minus, 1.0 / gamma)
    per_class = jnp.mean(focal, axis=0)                   # mean over batch, per class
    return jnp.sum(per_class * w)


def multi_tversky_loss_ref(inputs, targets, alpha=0.3, beta=0.7, gamma=2.0):
    """Pure-JAX reference matching the PyTorch module semantics."""
    N, C = inputs.shape[0], inputs.shape[1]
    s = alpha + beta
    if s != 1.0:
        alpha, beta = alpha / s, beta / s
    x = inputs.reshape(N, C, -1).astype(jnp.float32)
    t = targets.reshape(N, -1)
    total = jnp.float32(0.0)
    for c in range(C):
        p = x[:, c]
        lbl = (p > 0.5).astype(jnp.float32)
        tgt = (t == c).astype(jnp.float32)
        tp = jnp.sum(lbl * tgt, axis=1)
        fp = jnp.sum(lbl * (1.0 - tgt), axis=1)
        fn = jnp.sum((1.0 - lbl) * tgt, axis=1)
        index = tp / (tp + alpha * fp + beta * fn + 1e-6)
        total = total + jnp.mean(jnp.power(1.0 - index, 1.0 / gamma)) * (1.0 / C)
    return total


if __name__ == "__main__":
    key = jax.random.PRNGKey(0)
    k1, k2, k3, k4 = jax.random.split(key, 4)

    # --- primary small case (module-typical shapes) --------------------------------------
    N, C, H, W = 2, 4, 16, 16
    logits = jax.random.normal(k1, (N, C, H, W), dtype=jnp.float32)
    inputs = jax.nn.softmax(logits, axis=1)
    targets = jax.random.randint(k2, (N, H, W), 0, C, dtype=jnp.int32)

    loss = jax.block_until_ready(multi_tversky_loss(inputs, targets, 0.3, 0.7, 2.0))
    ref = jax.block_until_ready(multi_tversky_loss_ref(inputs, targets, 0.3, 0.7, 2.0))
    np.testing.assert_allclose(np.asarray(loss), np.asarray(ref), rtol=1e-5, atol=1e-6)

    # --- second case exercising the tiled path: ragged row mask, int8 targets,
    #     lane-remainder pad and the N==1 class-split parallel axis --------------------------
    N2, C2, H2, W2 = 1, 4, 79, 80
    logits2 = jax.random.normal(k3, (N2, C2, H2, W2), dtype=jnp.float32)
    inputs2 = jax.nn.softmax(logits2, axis=1)
    targets2 = jax.random.randint(k4, (N2, H2, W2), 0, C2, dtype=jnp.int32)

    loss2 = jax.block_until_ready(
        multi_tversky_loss(inputs2, targets2, 0.3, 0.7, 2.0, block_bytes=32 * 1024))
    ref2 = jax.block_until_ready(multi_tversky_loss_ref(inputs2, targets2, 0.3, 0.7, 2.0))
    np.testing.assert_allclose(np.asarray(loss2), np.asarray(ref2), rtol=1e-5, atol=1e-6)

    print("KERNEL_OK")
</pallas_src>

<mosaic_0001>
module attributes {stable_mosaic.version = 11 : i64} {
  func.func @_tversky_stats_kernel(%arg0: i32, %arg1: i32, %arg2: i32, %arg3: memref<1x4x2x128xf32, #tpu.memory_space<vmem>>, %arg4: memref<1x2x128xi32, #tpu.memory_space<vmem>>, %arg5: memref<1x12x1x128xf32, #tpu.memory_space<vmem>>) attributes {dimension_semantics = [#tpu.dimension_semantics<parallel>, #tpu.dimension_semantics<parallel>, #tpu.dimension_semantics<arbitrary>], iteration_bounds = array<i64: 2, 1, 1>, scalar_prefetch = 0 : i64, scratch_operands = 0 : i64, tpu.core_type = #tpu.core_type<tc>, window_params = [{transform_indices = @transform_0, window_bounds = array<i64: 1, 4, 2, 128>}, {transform_indices = @transform_1, window_bounds = array<i64: 1, 2, 128>}, {transform_indices = @transform_2, window_bounds = array<i64: 1, 12, 1, 128>}]} {
    %c0_i32 = arith.constant 0 : i32
    %0 = arith.cmpi eq, %arg2, %c0_i32 : i32
    %1 = arith.extui %0 : i1 to i32
    %c0_i32_0 = arith.constant 0 : i32
    %2 = arith.cmpi ne, %1, %c0_i32_0 : i32
    scf.if %2 {
      %cst_120 = arith.constant 0.000000e+00 : f32
      %145 = vector.broadcast %cst_120 : f32 to vector<1x12x1x128xf32>
      %c0_121 = arith.constant 0 : index
      %c0_122 = arith.constant 0 : index
      %c0_123 = arith.constant 0 : index
      %c0_124 = arith.constant 0 : index
      %146 = vector.load %arg5[%c0_121, %c0_122, %c0_123, %c0_124] : memref<1x12x1x128xf32, #tpu.memory_space<vmem>>, vector<1x12x1x128xf32>
      tpu.vector_store %arg5[%c0_121, %c0_122, %c0_123, %c0_124], %145 {strides = array<i32>} : memref<1x12x1x128xf32, #tpu.memory_space<vmem>>, vector<1x12x1x128xf32>,
    } else {
    }
    %c0 = arith.constant 0 : index
    %c0_1 = arith.constant 0 : index
    %c0_2 = arith.constant 0 : index
    %3 = vector.load %arg4[%c0, %c0_1, %c0_2] : memref<1x2x128xi32, #tpu.memory_space<vmem>>, vector<1x2x128xi32>
    %4 = vector.shape_cast %3 : vector<1x2x128xi32> to vector<2x128xi32>
    %c0_3 = arith.constant 0 : index
    %c0_4 = arith.constant 0 : index
    %c0_5 = arith.constant 0 : index
    %c0_6 = arith.constant 0 : index
    %5 = vector.load %arg3[%c0_3, %c0_4, %c0_5, %c0_6] : memref<1x4x2x128xf32, #tpu.memory_space<vmem>>, vector<1x1x2x128xf32>
    %6 = vector.shape_cast %5 : vector<1x1x2x128xf32> to vector<2x128xf32>
    %cst = arith.constant 5.000000e-01 : f32
    %7 = vector.broadcast %cst : f32 to vector<2x128xf32>
    %8 = arith.cmpf ogt, %6, %7 : vector<2x128xf32>
    %9 = arith.extui %8 : vector<2x128xi1> to vector<2x128xi32>
    %10 = arith.sitofp %9 : vector<2x128xi32> to vector<2x128xf32>
    %c0_i32_7 = arith.constant 0 : i32
    %11 = vector.broadcast %c0_i32_7 : i32 to vector<2x128xi32>
    %12 = arith.cmpi eq, %4, %11 : vector<2x128xi32>
    %13 = arith.extui %12 : vector<2x128xi1> to vector<2x128xi32>
    %14 = arith.sitofp %13 : vector<2x128xi32> to vector<2x128xf32>
    %c0_8 = arith.constant 0 : index
    %c0_9 = arith.constant 0 : index
    %c0_10 = arith.constant 0 : index
    %c0_11 = arith.constant 0 : index
    %15 = vector.load %arg5[%c0_8, %c0_9, %c0_10, %c0_11] : memref<1x12x1x128xf32, #tpu.memory_space<vmem>>, vector<1x1x1x128xf32>
    %16 = vector.shape_cast %15 : vector<1x1x1x128xf32> to vector<1x128xf32>
    %17 = arith.mulf %10, %14 : vector<2x128xf32>
    %cst_12 = arith.constant dense<0.000000e+00> : vector<128xf32>
    %18 = vector.multi_reduction <add>, %17, %cst_12 [0] : vector<2x128xf32> to vector<128xf32>
    %19 = vector.shape_cast %18 : vector<128xf32> to vector<1x128xf32>
    %20 = arith.addf %16, %19 : vector<1x128xf32>
    %c0_13 = arith.constant 0 : index
    %c0_14 = arith.constant 0 : index
    %c0_15 = arith.constant 0 : index
    %c0_16 = arith.constant 0 : index
    %21 = vector.load %arg5[%c0_13, %c0_14, %c0_15, %c0_16] : memref<1x12x1x128xf32, #tpu.memory_space<vmem>>, vector<1x1x1x128xf32>
    %22 = vector.shape_cast %21 : vector<1x1x1x128xf32> to vector<1x128xf32>
    %23 = vector.shape_cast %20 : vector<1x128xf32> to vector<1x1x1x128xf32>
    tpu.vector_store %arg5[%c0_13, %c0_14, %c0_15, %c0_16], %23 {strides = array<i32>} : memref<1x12x1x128xf32, #tpu.memory_space<vmem>>, vector<1x1x1x128xf32>,
    %c0_17 = arith.constant 0 : index
    %c1 = arith.constant 1 : index
    %c0_18 = arith.constant 0 : index
    %c0_19 = arith.constant 0 : index
    %24 = vector.load %arg5[%c0_17, %c1, %c0_18, %c0_19] : memref<1x12x1x128xf32, #tpu.memory_space<vmem>>, vector<1x1x1x128xf32>
    %25 = vector.shape_cast %24 : vector<1x1x1x128xf32> to vector<1x128xf32>
    %cst_20 = arith.constant dense<0.000000e+00> : vector<128xf32>
    %26 = vector.multi_reduction <add>, %10, %cst_20 [0] : vector<2x128xf32> to vector<128xf32>
    %27 = vector.shape_cast %26 : vector<128xf32> to vector<1x128xf32>
    %28 = arith.addf %25, %27 : vector<1x128xf32>
    %c0_21 = arith.constant 0 : index
    %c1_22 = arith.constant 1 : index
    %c0_23 = arith.constant 0 : index
    %c0_24 = arith.constant 0 : index
    %29 = vector.load %arg5[%c0_21, %c1_22, %c0_23, %c0_24] : memref<1x12x1x128xf32, #tpu.memory_space<vmem>>, vector<1x1x1x128xf32>
    %30 = vector.shape_cast %29 : vector<1x1x1x128xf32> to vector<1x128xf32>
    %31 = vector.shape_cast %28 : vector<1x128xf32> to vector<1x1x1x128xf32>
    tpu.vector_store %arg5[%c0_21, %c1_22, %c0_23, %c0_24], %31 {strides = array<i32>} : memref<1x12x1x128xf32, #tpu.memory_space<vmem>>, vector<1x1x1x128xf32>,
    %c0_25 = arith.constant 0 : index
    %c2 = arith.constant 2 : index
    %c0_26 = arith.constant 0 : index
    %c0_27 = arith.constant 0 : index
    %32 = vector.load %arg5[%c0_25, %c2, %c0_26, %c0_27] : memref<1x12x1x128xf32, #tpu.memory_space<vmem>>, vector<1x1x1x128xf32>
    %33 = vector.shape_cast %32 : vector<1x1x1x128xf32> to vector<1x128xf32>
    %cst_28 = arith.constant dense<0.000000e+00> : vector<128xf32>
    %34 = vector.multi_reduction <add>, %14, %cst_28 [0] : vector<2x128xf32> to vector<128xf32>
    %35 = vector.shape_cast %34 : vector<128xf32> to vector<1x128xf32>
    %36 = arith.addf %33, %35 : vector<1x128xf32>
    %c0_29 = arith.constant 0 : index
    %c2_30 = arith.constant 2 : index
    %c0_31 = arith.constant 0 : index
    %c0_32 = arith.constant 0 : index
    %37 = vector.load %arg5[%c0_29, %c2_30, %c0_31, %c0_32] : memref<1x12x1x128xf32, #tpu.memory_space<vmem>>, vector<1x1x1x128xf32>
    %38 = vector.shape_cast %37 : vector<1x1x1x128xf32> to vector<1x128xf32>
    %39 = vector.shape_cast %36 : vector<1x128xf32> to vector<1x1x1x128xf32>
    tpu.vector_store %arg5[%c0_29, %c2_30, %c0_31, %c0_32], %39 {strides = array<i32>} : memref<1x12x1x128xf32, #tpu.memory_space<vmem>>, vector<1x1x1x128xf32>,
    %c0_33 = arith.constant 0 : index
    %c1_34 = arith.constant 1 : index
    %c0_35 = arith.constant 0 : index
    %c0_36 = arith.constant 0 : index
    %40 = vector.load %arg3[%c0_33, %c1_34, %c0_35, %c0_36] : memref<1x4x2x128xf32, #tpu.memory_space<vmem>>, vector<1x1x2x128xf32>
    %41 = vector.shape_cast %40 : vector<1x1x2x128xf32> to vector<2x128xf32>
    %cst_37 = arith.constant 5.000000e-01 : f32
    %42 = vector.broadcast %cst_37 : f32 to vector<2x128xf32>
    %43 = arith.cmpf ogt, %41, %42 : vector<2x128xf32>
    %44 = arith.extui %43 : vector<2x128xi1> to vector<2x128xi32>
    %45 = arith.sitofp %44 : vector<2x128xi32> to vector<2x128xf32>
    %c1_i32 = arith.constant 1 : i32
    %46 = vector.broadcast %c1_i32 : i32 to vector<2x128xi32>
    %47 = arith.cmpi eq, %4, %46 : vector<2x128xi32>
    %48 = arith.extui %47 : vector<2x128xi1> to vector<2x128xi32>
    %49 = arith.sitofp %48 : vector<2x128xi32> to vector<2x128xf32>
    %c0_38 = arith.constant 0 : index
    %c3 = arith.constant 3 : index
    %c0_39 = arith.constant 0 : index
    %c0_40 = arith.constant 0 : index
    %50 = vector.load %arg5[%c0_38, %c3, %c0_39, %c0_40] : memref<1x12x1x128xf32, #tpu.memory_space<vmem>>, vector<1x1x1x128xf32>
    %51 = vector.shape_cast %50 : vector<1x1x1x128xf32> to vector<1x128xf32>
    %52 = arith.mulf %45, %49 : vector<2x128xf32>
    %cst_41 = arith.constant dense<0.000000e+00> : vector<128xf32>
    %53 = vector.multi_reduction <add>, %52, %cst_41 [0] : vector<2x128xf32> to vector<128xf32>
    %54 = vector.shape_cast %53 : vector<128xf32> to vector<1x128xf32>
    %55 = arith.addf %51, %54 : vector<1x128xf32>
    %c0_42 = arith.constant 0 : index
    %c3_43 = arith.constant 3 : index
    %c0_44 = arith.constant 0 : index
    %c0_45 = arith.constant 0 : index
    %56 = vector.load %arg5[%c0_42, %c3_43, %c0_44, %c0_45] : memref<1x12x1x128xf32, #tpu.memory_space<vmem>>, vector<1x1x1x128xf32>
    %57 = vector.shape_cast %56 : vector<1x1x1x128xf32> to vector<1x128xf32>
    %58 = vector.shape_cast %55 : vector<1x128xf32> to vector<1x1x1x128xf32>
    tpu.vector_store %arg5[%c0_42, %c3_43, %c0_44, %c0_45], %58 {strides = array<i32>} : memref<1x12x1x128xf32, #tpu.memory_space<vmem>>, vector<1x1x1x128xf32>,
    %c0_46 = arith.constant 0 : index
    %c4 = arith.constant 4 : index
    %c0_47 = arith.constant 0 : index
    %c0_48 = arith.constant 0 : index
    %59 = vector.load %arg5[%c0_46, %c4, %c0_47, %c0_48] : memref<1x12x1x128xf32, #tpu.memory_space<vmem>>, vector<1x1x1x128xf32>
    %60 = vector.shape_cast %59 : vector<1x1x1x128xf32> to vector<1x128xf32>
    %cst_49 = arith.constant dense<0.000000e+00> : vector<128xf32>
    %61 = vector.multi_reduction <add>, %45, %cst_49 [0] : vector<2x128xf32> to vector<128xf32>
    %62 = vector.shape_cast %61 : vector<128xf32> to vector<1x128xf32>
    %63 = arith.addf %60, %62 : vector<1x128xf32>
    %c0_50 = arith.constant 0 : index
    %c4_51 = arith.constant 4 : index
    %c0_52 = arith.constant 0 : index
    %c0_53 = arith.constant 0 : index
    %64 = vector.load %arg5[%c0_50, %c4_51, %c0_52, %c0_53] : memref<1x12x1x128xf32, #tpu.memory_space<vmem>>, vector<1x1x1x128xf32>
    %65 = vector.shape_cast %64 : vector<1x1x1x128xf32> to vector<1x128xf32>
    %66 = vector.shape_cast %63 : vector<1x128xf32> to vector<1x1x1x128xf32>
    tpu.vector_store %arg5[%c0_50, %c4_51, %c0_52, %c0_53], %66 {strides = array<i32>} : memref<1x12x1x128xf32, #tpu.memory_space<vmem>>, vector<1x1x1x128xf32>,
    %c0_54 = arith.constant 0 : index
    %c5 = arith.constant 5 : index
    %c0_55 = arith.constant 0 : index
    %c0_56 = arith.constant 0 : index
    %67 = vector.load %arg5[%c0_54, %c5, %c0_55, %c0_56] : memref<1x12x1x128xf32, #tpu.memory_space<vmem>>, vector<1x1x1x128xf32>
    %68 = vector.shape_cast %67 : vector<1x1x1x128xf32> to vector<1x128xf32>
    %cst_57 = arith.constant dense<0.000000e+00> : vector<128xf32>
    %69 = vector.multi_reduction <add>, %49, %cst_57 [0] : vector<2x128xf32> to vector<128xf32>
    %70 = vector.shape_cast %69 : vector<128xf32> to vector<1x128xf32>
    %71 = arith.addf %68, %70 : vector<1x128xf32>
    %c0_58 = arith.constant 0 : index
    %c5_59 = arith.constant 5 : index
    %c0_60 = arith.constant 0 : index
    %c0_61 = arith.constant 0 : index
    %72 = vector.load %arg5[%c0_58, %c5_59, %c0_60, %c0_61] : memref<1x12x1x128xf32, #tpu.memory_space<vmem>>, vector<1x1x1x128xf32>
    %73 = vector.shape_cast %72 : vector<1x1x1x128xf32> to vector<1x128xf32>
    %74 = vector.shape_cast %71 : vector<1x128xf32> to vector<1x1x1x128xf32>
    tpu.vector_store %arg5[%c0_58, %c5_59, %c0_60, %c0_61], %74 {strides = array<i32>} : memref<1x12x1x128xf32, #tpu.memory_space<vmem>>, vector<1x1x1x128xf32>,
    %c0_62 = arith.constant 0 : index
    %c2_63 = arith.constant 2 : index
    %c0_64 = arith.constant 0 : index
    %c0_65 = arith.constant 0 : index
    %75 = vector.load %arg3[%c0_62, %c2_63, %c0_64, %c0_65] : memref<1x4x2x128xf32, #tpu.memory_space<vmem>>, vector<1x1x2x128xf32>
    %76 = vector.shape_cast %75 : vector<1x1x2x128xf32> to vector<2x128xf32>
    %cst_66 = arith.constant 5.000000e-01 : f32
    %77 = vector.broadcast %cst_66 : f32 to vector<2x128xf32>
    %78 = arith.cmpf ogt, %76, %77 : vector<2x128xf32>
    %79 = arith.extui %78 : vector<2x128xi1> to vector<2x128xi32>
    %80 = arith.sitofp %79 : vector<2x128xi32> to vector<2x128xf32>
    %c2_i32 = arith.constant 2 : i32
    %81 = vector.broadcast %c2_i32 : i32 to vector<2x128xi32>
    %82 = arith.cmpi eq, %4, %81 : vector<2x128xi32>
    %83 = arith.extui %82 : vector<2x128xi1> to vector<2x128xi32>
    %84 = arith.sitofp %83 : vector<2x128xi32> to vector<2x128xf32>
    %c0_67 = arith.constant 0 : index
    %c6 = arith.constant 6 : index
    %c0_68 = arith.constant 0 : index
    %c0_69 = arith.constant 0 : index
    %85 = vector.load %arg5[%c0_67, %c6, %c0_68, %c0_69] : memref<1x12x1x128xf32, #tpu.memory_space<vmem>>, vector<1x1x1x128xf32>
    %86 = vector.shape_cast %85 : vector<1x1x1x128xf32> to vector<1x128xf32>
    %87 = arith.mulf %80, %84 : vector<2x128xf32>
    %cst_70 = arith.constant dense<0.000000e+00> : vector<128xf32>
    %88 = vector.multi_reduction <add>, %87, %cst_70 [0] : vector<2x128xf32> to vector<128xf32>
    %89 = vector.shape_cast %88 : vector<128xf32> to vector<1x128xf32>
    %90 = arith.addf %86, %89 : vector<1x128xf32>
    %c0_71 = arith.constant 0 : index
    %c6_72 = arith.constant 6 : index
    %c0_73 = arith.constant 0 : index
    %c0_74 = arith.constant 0 : index
    %91 = vector.load %arg5[%c0_71, %c6_72, %c0_73, %c0_74] : memref<1x12x1x128xf32, #tpu.memory_space<vmem>>, vector<1x1x1x128xf32>
    %92 = vector.shape_cast %91 : vector<1x1x1x128xf32> to vector<1x128xf32>
    %93 = vector.shape_cast %90 : vector<1x128xf32> to vector<1x1x1x128xf32>
    tpu.vector_store %arg5[%c0_71, %c6_72, %c0_73, %c0_74], %93 {strides = array<i32>} : memref<1x12x1x128xf32, #tpu.memory_space<vmem>>, vector<1x1x1x128xf32>,
    %c0_75 = arith.constant 0 : index
    %c7 = arith.constant 7 : index
    %c0_76 = arith.constant 0 : index
    %c0_77 = arith.constant 0 : index
    %94 = vector.load %arg5[%c0_75, %c7, %c0_76, %c0_77] : memref<1x12x1x128xf32, #tpu.memory_space<vmem>>, vector<1x1x1x128xf32>
    %95 = vector.shape_cast %94 : vector<1x1x1x128xf32> to vector<1x128xf32>
    %cst_78 = arith.constant dense<0.000000e+00> : vector<128xf32>
    %96 = vector.multi_reduction <add>, %80, %cst_78 [0] : vector<2x128xf32> to vector<128xf32>
    %97 = vector.shape_cast %96 : vector<128xf32> to vector<1x128xf32>
    %98 = arith.addf %95, %97 : vector<1x128xf32>
    %c0_79 = arith.constant 0 : index
    %c7_80 = arith.constant 7 : index
    %c0_81 = arith.constant 0 : index
    %c0_82 = arith.constant 0 : index
    %99 = vector.load %arg5[%c0_79, %c7_80, %c0_81, %c0_82] : memref<1x12x1x128xf32, #tpu.memory_space<vmem>>, vector<1x1x1x128xf32>
    %100 = vector.shape_cast %99 : vector<1x1x1x128xf32> to vector<1x128xf32>
    %101 = vector.shape_cast %98 : vector<1x128xf32> to vector<1x1x1x128xf32>
    tpu.vector_store %arg5[%c0_79, %c7_80, %c0_81, %c0_82], %101 {strides = array<i32>} : memref<1x12x1x128xf32, #tpu.memory_space<vmem>>, vector<1x1x1x128xf32>,
    %c0_83 = arith.constant 0 : index
    %c8 = arith.constant 8 : index
    %c0_84 = arith.constant 0 : index
    %c0_85 = arith.constant 0 : index
    %102 = vector.load %arg5[%c0_83, %c8, %c0_84, %c0_85] : memref<1x12x1x128xf32, #tpu.memory_space<vmem>>, vector<1x1x1x128xf32>
    %103 = vector.shape_cast %102 : vector<1x1x1x128xf32> to vector<1x128xf32>
    %cst_86 = arith.constant dense<0.000000e+00> : vector<128xf32>
    %104 = vector.multi_reduction <add>, %84, %cst_86 [0] : vector<2x128xf32> to vector<128xf32>
    %105 = vector.shape_cast %104 : vector<128xf32> to vector<1x128xf32>
    %106 = arith.addf %103, %105 : vector<1x128xf32>
    %c0_87 = arith.constant 0 : index
    %c8_88 = arith.constant 8 : index
    %c0_89 = arith.constant 0 : index
    %c0_90 = arith.constant 0 : index
    %107 = vector.load %arg5[%c0_87, %c8_88, %c0_89, %c0_90] : memref<1x12x1x128xf32, #tpu.memory_space<vmem>>, vector<1x1x1x128xf32>
    %108 = vector.shape_cast %107 : vector<1x1x1x128xf32> to vector<1x128xf32>
    %109 = vector.shape_cast %106 : vector<1x128xf32> to vector<1x1x1x128xf32>
    tpu.vector_store %arg5[%c0_87, %c8_88, %c0_89, %c0_90], %109 {strides = array<i32>} : memref<1x12x1x128xf32, #tpu.memory_space<vmem>>, vector<1x1x1x128xf32>,
    %c0_91 = arith.constant 0 : index
    %c3_92 = arith.constant 3 : index
    %c0_93 = arith.constant 0 : index
    %c0_94 = arith.constant 0 : index
    %110 = vector.load %arg3[%c0_91, %c3_92, %c0_93, %c0_94] : memref<1x4x2x128xf32, #tpu.memory_space<vmem>>, vector<1x1x2x128xf32>
    %111 = vector.shape_cast %110 : vector<1x1x2x128xf32> to vector<2x128xf32>
    %cst_95 = arith.constant 5.000000e-01 : f32
    %112 = vector.broadcast %cst_95 : f32 to vector<2x128xf32>
    %113 = arith.cmpf ogt, %111, %112 : vector<2x128xf32>
    %114 = arith.extui %113 : vector<2x128xi1> to vector<2x128xi32>
    %115 = arith.sitofp %114 : vector<2x128xi32> to vector<2x128xf32>
    %c3_i32 = arith.constant 3 : i32
    %116 = vector.broadcast %c3_i32 : i32 to vector<2x128xi32>
    %117 = arith.cmpi eq, %4, %116 : vector<2x128xi32>
    %118 = arith.extui %117 : vector<2x128xi1> to vector<2x128xi32>
    %119 = arith.sitofp %118 : vector<2x128xi32> to vector<2x128xf32>
    %c0_96 = arith.constant 0 : index
    %c9 = arith.constant 9 : index
    %c0_97 = arith.constant 0 : index
    %c0_98 = arith.constant 0 : index
    %120 = vector.load %arg5[%c0_96, %c9, %c0_97, %c0_98] : memref<1x12x1x128xf32, #tpu.memory_space<vmem>>, vector<1x1x1x128xf32>
    %121 = vector.shape_cast %120 : vector<1x1x1x128xf32> to vector<1x128xf32>
    %122 = arith.mulf %115, %119 : vector<2x128xf32>
    %cst_99 = arith.constant dense<0.000000e+00> : vector<128xf32>
    %123 = vector.multi_reduction <add>, %122, %cst_99 [0] : vector<2x128xf32> to vector<128xf32>
    %124 = vector.shape_cast %123 : vector<128xf32> to vector<1x128xf32>
    %125 = arith.addf %121, %124 : vector<1x128xf32>
    %c0_100 = arith.constant 0 : index
    %c9_101 = arith.constant 9 : index
    %c0_102 = arith.constant 0 : index
    %c0_103 = arith.constant 0 : index
    %126 = vector.load %arg5[%c0_100, %c9_101, %c0_102, %c0_103] : memref<1x12x1x128xf32, #tpu.memory_space<vmem>>, vector<1x1x1x128xf32>
    %127 = vector.shape_cast %126 : vector<1x1x1x128xf32> to vector<1x128xf32>
    %128 = vector.shape_cast %125 : vector<1x128xf32> to vector<1x1x1x128xf32>
    tpu.vector_store %arg5[%c0_100, %c9_101, %c0_102, %c0_103], %128 {strides = array<i32>} : memref<1x12x1x128xf32, #tpu.memory_space<vmem>>, vector<1x1x1x128xf32>,
    %c0_104 = arith.constant 0 : index
    %c10 = arith.constant 10 : index
    %c0_105 = arith.constant 0 : index
    %c0_106 = arith.constant 0 : index
    %129 = vector.load %arg5[%c0_104, %c10, %c0_105, %c0_106] : memref<1x12x1x128xf32, #tpu.memory_space<vmem>>, vector<1x1x1x128xf32>
    %130 = vector.shape_cast %129 : vector<1x1x1x128xf32> to vector<1x128xf32>
    %cst_107 = arith.constant dense<0.000000e+00> : vector<128xf32>
    %131 = vector.multi_reduction <add>, %115, %cst_107 [0] : vector<2x128xf32> to vector<128xf32>
    %132 = vector.shape_cast %131 : vector<128xf32> to vector<1x128xf32>
    %133 = arith.addf %130, %132 : vector<1x128xf32>
    %c0_108 = arith.constant 0 : index
    %c10_109 = arith.constant 10 : index
    %c0_110 = arith.constant 0 : index
    %c0_111 = arith.constant 0 : index
    %134 = vector.load %arg5[%c0_108, %c10_109, %c0_110, %c0_111] : memref<1x12x1x128xf32, #tpu.memory_space<vmem>>, vector<1x1x1x128xf32>
    %135 = vector.shape_cast %134 : vector<1x1x1x128xf32> to vector<1x128xf32>
    %136 = vector.shape_cast %133 : vector<1x128xf32> to vector<1x1x1x128xf32>
    tpu.vector_store %arg5[%c0_108, %c10_109, %c0_110, %c0_111], %136 {strides = array<i32>} : memref<1x12x1x128xf32, #tpu.memory_space<vmem>>, vector<1x1x1x128xf32>,
    %c0_112 = arith.constant 0 : index
    %c11 = arith.constant 11 : index
    %c0_113 = arith.constant 0 : index
    %c0_114 = arith.constant 0 : index
    %137 = vector.load %arg5[%c0_112, %c11, %c0_113, %c0_114] : memref<1x12x1x128xf32, #tpu.memory_space<vmem>>, vector<1x1x1x128xf32>
    %138 = vector.shape_cast %137 : vector<1x1x1x128xf32> to vector<1x128xf32>
    %cst_115 = arith.constant dense<0.000000e+00> : vector<128xf32>
    %139 = vector.multi_reduction <add>, %119, %cst_115 [0] : vector<2x128xf32> to vector<128xf32>
    %140 = vector.shape_cast %139 : vector<128xf32> to vector<1x128xf32>
    %141 = arith.addf %138, %140 : vector<1x128xf32>
    %c0_116 = arith.constant 0 : index
    %c11_117 = arith.constant 11 : index
    %c0_118 = arith.constant 0 : index
    %c0_119 = arith.constant 0 : index
    %142 = vector.load %arg5[%c0_116, %c11_117, %c0_118, %c0_119] : memref<1x12x1x128xf32, #tpu.memory_space<vmem>>, vector<1x1x1x128xf32>
    %143 = vector.shape_cast %142 : vector<1x1x1x128xf32> to vector<1x128xf32>
    %144 = vector.shape_cast %141 : vector<1x128xf32> to vector<1x1x1x128xf32>
    tpu.vector_store %arg5[%c0_116, %c11_117, %c0_118, %c0_119], %144 {strides = array<i32>} : memref<1x12x1x128xf32, #tpu.memory_space<vmem>>, vector<1x1x1x128xf32>,
    return
  }
  func.func @transform_0(%arg0: i32, %arg1: i32, %arg2: i32) -> (i32, i32, i32, i32) {
    %c0_i32 = arith.constant 0 : i32
    %c0_i32_0 = arith.constant 0 : i32
    return %arg0, %arg1, %arg2, %c0_i32 : i32, i32, i32, i32
  }
  func.func @transform_1(%arg0: i32, %arg1: i32, %arg2: i32) -> (i32, i32, i32) {
    %c0_i32 = arith.constant 0 : i32
    %c0_i32_0 = arith.constant 0 : i32
    return %arg0, %arg2, %c0_i32 : i32, i32, i32
  }
  func.func @transform_2(%arg0: i32, %arg1: i32, %arg2: i32) -> (i32, i32, i32, i32) {
    %c0_i32 = arith.constant 0 : i32
    %c0_i32_0 = arith.constant 0 : i32
    %c0_i32_1 = arith.constant 0 : i32
    return %arg0, %arg1, %c0_i32, %c0_i32_0 : i32, i32, i32, i32
  }
}

</mosaic_0001>

<llo_original>
// kernel: tpu_custom_call.1
$region0: #{tpu_custom_call.1}
  #allocation0 [shape = 'u32[]', space=smem, size = 0x4, offset = 0x4, fixed_abs, tag = 'smem constant byte address 0x4 - core index']
  #allocation1 [shape = 'u32[72,128]{1,0:T(1,128)}', space=vmem, size = 0x9000, scoped, tag = 'internal scratch']
  %s0 = inlined_call_operand.hbm [shape: f32[2,4,2,128], index: 0, kind: input, shape index: {}]
  %s1 = inlined_call_operand.hbm [shape: s32[2,2,128], index: 1, kind: input, shape index: {}]
  %s2 = inlined_call_operand.hbm [shape: f32[2,12,1,128], index: 2, kind: output, shape index: {}]
  %s3 = sld [smem:[#allocation0]]
  $region53: #{tpu_custom_call.1} parent=0
    _
  %s5 = ssub.s32 1, %s3
  %s6 = scalar_select 0, %s5, %s3
  $region1: #{tpu_custom_call.1} parent=0
    #allocation2 [shape = 'u8[8192]{0}', space=vmem, size = 0x2000, scoped, tag = 'input window, operand 0']
    #allocation3 [shape = 's32[2]{0}', space=sflag, size = 0x8, scoped, tag = 'scoped memory for tpu_custom_call.1']
    #allocation4 [shape = 's32[2]{0}', space=sflag, size = 0x8, scoped, tag = 'scoped memory for tpu_custom_call.1']
    #allocation5 [shape = 'u8[2048]{0}', space=vmem, size = 0x800, scoped, tag = 'input window, operand 1']
    #allocation6 [shape = 's32[2]{0}', space=sflag, size = 0x8, scoped, tag = 'scoped memory for tpu_custom_call.1']
    #allocation7 [shape = 'u8[12288]{0}', space=vmem, size = 0x3000, scoped, tag = 'output window, operand 0']
    %7 = vsyncpa [#allocation3], 0
    %s8 = scalar_lea.sflag [#allocation3], 1
    %9 = vsyncpa %s8, 0
    %10 = vsyncpa [#allocation6], 0
    %s11 = scalar_lea.sflag [#allocation6], 1
    %12 = vsyncpa %s11, 0
    %13 = vsyncpa [#allocation4], 0
    %s14 = scalar_lea.sflag [#allocation4], 1
    %15 = vsyncpa %s14, 0
    loop: start=0, step=1, limit=4
    $region2: #{tpu_custom_call.1} parent=1 // loop_pre_header
      _
    $region3: #{tpu_custom_call.1} parent=1 // loop_header
      %s17 = sphi 0, %s21
      %p18 = scmp.ge.s32.totalorder %s17, 4
      %s24 = sphi 0, %s43
      %s25 = sphi 0, %s39
      %s26 = sphi 0, %s35
      %s27 = sphi 0, %s24
      %s28 = sphi 0, %s25
      %s29 = sphi 0, %s26
      %s30 = sphi 0, %s27
      %s31 = sphi 0, %s28
      %s32 = sphi 0, %s29
      %s50 = sphi 0, %s52
      %s53 = sphi 0, %s50
      %s54 = sphi 0, %s53
      %s70 = sphi 0, %s54
      %s78 = sphi 0, %s80
      %s81 = sphi 0, %s78
      %s82 = sphi 0, %s81
      %s98 = sphi 0, %s82
      %s106 = sphi 0, %s108
      %s109 = sphi 0, %s106
      %s110 = sphi 0, %s109
      %s126 = sphi 0, %s110
    $region4: #{tpu_custom_call.1} parent=1 // loop_header_branch
      %20 = sbr.rel (%p18) target = $region8
    $region5: #{tpu_custom_call.1} parent=1 // loop_body
      %s22 = ssub.s32 %s17, 1
      %s23 = ssub.s32 %s17, 2
      %s33 = sadd.s32 1, %s26
      %p34 = scmp.ge.s32.totalorder %s33, 1
      %s35 = scalar_select %p34, 0, %s33
      %s36 = sadd.s32 1, %s25
      %s37 = scalar_select %p34, %s36, %s25
      %p38 = scmp.ge.s32.totalorder %s37, 1
      %s39 = scalar_select %p38, 0, %s37
      %s40 = sadd.s32 1, %s24
      %s41 = scalar_select %p38, %s40, %s24
      %p42 = scmp.ge.s32.totalorder %s41, 2
      %s43 = scalar_select %p42, 0, %s41
      %s44 = ssub.s32 %s24, %s43
      %s45 = ssub.s32 %s25, %s39
      %s46 = sor.u32 %s44, %s45
      %s47 = ssub.s32 %s26, %s35
      %s48 = sor.u32 %s46, %s47
      %p49 = scmp.eq.s32.totalorder %s48, 0
      %s51 = sadd.s32 %s50, 1
      %s52 = scalar_select %p49, %s50, %s51
      %p55 = pneg %p49
      %p56 = scmp.eq.s32.totalorder %s17, 1
      %p57 = por %p55, %p56
      %p58 = scmp.ne.s32.totalorder %s50, %s53
      %p59 = scmp.eq.s32.totalorder %s17, 0
      %p60 = por %p58, %p59
      %p61 = scmp.ne.s32.totalorder %s50, %s53
      %p62 = scmp.eq.s32.totalorder %s22, 1
      %p63 = por %p61, %p62
      %p64 = scmp.ne.s32.totalorder %s53, %s54
      %p65 = scmp.eq.s32.totalorder %s22, 0
      %p66 = por %p64, %p65
      %p67 = scmp.ne.s32.totalorder %s53, %s54
      %p68 = scmp.eq.s32.totalorder %s23, 1
      %p69 = por %p67, %p68
      %p71 = scmp.ne.s32.totalorder %s54, %s70
      %p72 = scmp.eq.s32.totalorder %s23, 0
      %p73 = por %p71, %p72
      %s74 = ssub.s32 %s24, %s43
      %s75 = ssub.s32 %s26, %s35
      %s76 = sor.u32 %s74, %s75
      %p77 = scmp.eq.s32.totalorder %s76, 0
      %s79 = sadd.s32 %s78, 1
      %s80 = scalar_select %p77, %s78, %s79
      %p83 = pneg %p77
      %p84 = scmp.eq.s32.totalorder %s17, 1
      %p85 = por %p83, %p84
      %p86 = scmp.ne.s32.totalorder %s78, %s81
      %p87 = scmp.eq.s32.totalorder %s17, 0
      %p88 = por %p86, %p87
      %p89 = scmp.ne.s32.totalorder %s78, %s81
      %p90 = scmp.eq.s32.totalorder %s22, 1
      %p91 = por %p89, %p90
      %p92 = scmp.ne.s32.totalorder %s81, %s82
      %p93 = scmp.eq.s32.totalorder %s22, 0
      %p94 = por %p92, %p93
      %p95 = scmp.ne.s32.totalorder %s81, %s82
      %p96 = scmp.eq.s32.totalorder %s23, 1
      %p97 = por %p95, %p96
      %p99 = scmp.ne.s32.totalorder %s82, %s98
      %p100 = scmp.eq.s32.totalorder %s23, 0
      %p101 = por %p99, %p100
      %s102 = ssub.s32 %s24, %s43
      %s103 = ssub.s32 %s25, %s39
      %s104 = sor.u32 %s102, %s103
      %p105 = scmp.eq.s32.totalorder %s104, 0
      %s107 = sadd.s32 %s106, 1
      %s108 = scalar_select %p105, %s106, %s107
      %p111 = pneg %p105
      %p112 = scmp.eq.s32.totalorder %s17, 1
      %p113 = por %p111, %p112
      %p114 = scmp.ne.s32.totalorder %s106, %s109
      %p115 = scmp.eq.s32.totalorder %s17, 0
      %p116 = por %p114, %p115
      %p117 = scmp.ne.s32.totalorder %s106, %s109
      %p118 = scmp.eq.s32.totalorder %s22, 1
      %p119 = por %p117, %p118
      %p120 = scmp.ne.s32.totalorder %s109, %s110
      %p121 = scmp.eq.s32.totalorder %s22, 0
      %p122 = por %p120, %p121
      %p123 = scmp.ne.s32.totalorder %s109, %s110
      %p124 = scmp.eq.s32.totalorder %s23, 1
      %p125 = por %p123, %p124
      %p127 = scmp.ne.s32.totalorder %s110, %s126
      %p128 = scmp.eq.s32.totalorder %s23, 0
      %p129 = por %p127, %p128
      %p130 = scmp.le.s32.totalorder 1, %s17
      %p131 = scmp.lt.s32.totalorder %s17, 3
      %p132 = pnand %p130, %p131
      %p133 = pneg %p132
      // Predicated region
      $region9: #{tpu_custom_call.1} parent=5 // pred_check
        _
      $region10: #{tpu_custom_call.1} parent=5 // pred_check_branch
        %135 = sbr.rel (%p132) target = $region12
      $region11: #{tpu_custom_call.1} parent=5 // pred_region
        %s136 = ssub.s32 %s17, 1
      $region12: #{tpu_custom_call.1} parent=5 // pred_fallthru
        _
      %p137 = scmp.lt.s32.totalorder %s17, 2
      // Predicated region
      $region13: #{tpu_custom_call.1} parent=5 // pred_check
        %p138 = pneg %p137
      $region14: #{tpu_custom_call.1} parent=5 // pred_check_branch
        %140 = sbr.rel (%p138) target = $region16
      $region15: #{tpu_custom_call.1} parent=5 // pred_region
        // Predicated region
        $region17: #{tpu_custom_call.1} parent=15 // pred_check
          %p141 = pneg %p60
        $region18: #{tpu_custom_call.1} parent=15 // pred_check_branch
          %143 = sbr.rel (%p141) target = $region20
        $region19: #{tpu_custom_call.1} parent=15 // pred_region
          %s144 = sand.u32 %s50, 1
          %s145 = scalar_lea.sflag [#allocation3], %s144
          %s146 = sand.u32 %s50, 1
          %s147 = smul.addr %s146, 8
          %s148 = scalar_lea.vmem [#allocation2], %s147
          %s149 = smul.u32 4, %s25
          %151 = vsyncadd %s145, 0
          %s152 = sadd.s32 %s26, %s149
          %s153 = smul.addr %s24, 4
          %s154 = sadd.s32 %s152, %s153
          %s155 = smul.addr %s154, 2
          %s156 = scalar_lea.hbm %s0, %s155
          %s157 = sshll.u32 %s156, 4
          %s158 = int_to_ptr.hbm [resolvable:$true] %s157
          %s159 = sshll.u32 %s148, 4
          %s160 = int_to_ptr.vmem [resolvable:$true] %s159
          %165 = dma.hbm_to_vmem [thread:$0]  %s158, 128, %s160, %s145, 32, 32, 2
        $region20: #{tpu_custom_call.1} parent=15 // pred_fallthru
          _
        // Predicated region
        $region21: #{tpu_custom_call.1} parent=15 // pred_check
          %p166 = pneg %p88
        $region22: #{tpu_custom_call.1} parent=15 // pred_check_branch
          %168 = sbr.rel (%p166) target = $region24
        $region23: #{tpu_custom_call.1} parent=15 // pred_region
          %s169 = sand.u32 %s78, 1
          %s170 = scalar_lea.sflag [#allocation6], %s169
          %s171 = sand.u32 %s78, 1
          %s172 = smul.addr %s171, 2
          %s173 = scalar_lea.vmem [#allocation5], %s172
          %175 = vsyncadd %s170, 0
          %s176 = sadd.s32 %s26, %s24
          %s177 = smul.addr %s176, 2
          %s178 = scalar_lea.hbm %s1, %s177
          %s180 = sshll.u32 %s178, 4
          %s181 = int_to_ptr.hbm [resolvable:$true] %s180
          %s182 = sshll.u32 %s173, 4
          %s183 = int_to_ptr.vmem [resolvable:$true] %s182
          %185 = dma.hbm_to_vmem [thread:$0]  %s181, 32, %s183, %s170
        $region24: #{tpu_custom_call.1} parent=15 // pred_fallthru
          _
      $region16: #{tpu_custom_call.1} parent=5 // pred_fallthru
        _
      %p186 = scmp.le.s32.totalorder 1, %s17
      %p187 = scmp.lt.s32.totalorder %s17, 3
      %p188 = pnand %p186, %p187
      %p189 = pneg %p188
      // Predicated region
      $region25: #{tpu_custom_call.1} parent=5 // pred_check
        _
      $region26: #{tpu_custom_call.1} parent=5 // pred_check_branch
        %191 = sbr.rel (%p188) target = $region28
      $region27: #{tpu_custom_call.1} parent=5 // pred_region
        %s192 = ssub.s32 %s17, 1
        %s193 = sand.u32 %s53, 1
        %s194 = scalar_lea.sflag [#allocation3], %s193
        %s195 = sand.u32 %s53, 1
        %s196 = smul.addr %s195, 8
        %s197 = scalar_lea.vmem [#allocation2], %s196
        // Predicated region
        $region29: #{tpu_custom_call.1} parent=27 // pred_check
          %p198 = pneg %p66
        $region30: #{tpu_custom_call.1} parent=27 // pred_check_branch
          %200 = sbr.rel (%p198) target = $region32
        $region31: #{tpu_custom_call.1} parent=27 // pred_region
          %202 = dma.done %s194, 128
        $region32: #{tpu_custom_call.1} parent=27 // pred_fallthru
          _
        %s203 = sand.u32 %s81, 1
        %s204 = scalar_lea.sflag [#allocation6], %s203
        %s205 = sand.u32 %s81, 1
        %s206 = smul.addr %s205, 2
        %s207 = scalar_lea.vmem [#allocation5], %s206
        // Predicated region
        $region33: #{tpu_custom_call.1} parent=27 // pred_check
          %p208 = pneg %p94
        $region34: #{tpu_custom_call.1} parent=27 // pred_check_branch
          %210 = sbr.rel (%p208) target = $region36
        $region35: #{tpu_custom_call.1} parent=27 // pred_region
          %212 = dma.done %s204, 32
        $region36: #{tpu_custom_call.1} parent=27 // pred_fallthru
          _
        %s213 = sand.u32 %s53, 1
        %s214 = scalar_lea.sflag [#allocation3], %s213
        %s215 = sand.u32 %s53, 1
        %s216 = smul.addr %s215, 8
        %s217 = scalar_lea.vmem [#allocation2], %s216
        %p218 = pneg %p66
        %p219 = pneg %p63
        %s220 = sand.u32 %s81, 1
        %s221 = scalar_lea.sflag [#allocation6], %s220
        %s222 = sand.u32 %s81, 1
        %s223 = smul.addr %s222, 2
        %s224 = scalar_lea.vmem [#allocation5], %s223
        %p225 = pneg %p94
        %p226 = pneg %p91
        %p227 = pneg %p122
        %p228 = pneg %p119
        %s229 = sand.u32 %s109, 1
        %s230 = scalar_lea.sflag [#allocation4], %s229
        %s231 = sand.u32 %s109, 1
        %s232 = smul.addr %s231, 12
        %s233 = scalar_lea.vmem [#allocation7], %s232
        %s234 = smul.u32 4, %s28
        %s235 = smul.u32 12, %s28
        %p236 = scmp.eq.s32.totalorder %s29, 0
        // Predicated region
        $region37: #{tpu_custom_call.1} parent=27 // pred_check
          %p237 = pneg %p236
        $region38: #{tpu_custom_call.1} parent=27 // pred_check_branch
          %239 = sbr.rel (%p237) target = $region40
        $region39: #{tpu_custom_call.1} parent=27 // pred_region
          %240 = vst [vmem:[%s233] sm:$0x1] 0.0
          %241 = vst [vmem:[%s233 + $0x1] sm:$0x1] 0.0
          %242 = vst [vmem:[%s233 + $0x2] sm:$0x1] 0.0
          %243 = vst [vmem:[%s233 + $0x3] sm:$0x1] 0.0
          %244 = vst [vmem:[%s233 + $0x4] sm:$0x1] 0.0
          %245 = vst [vmem:[%s233 + $0x5] sm:$0x1] 0.0
          %246 = vst [vmem:[%s233 + $0x6] sm:$0x1] 0.0
          %247 = vst [vmem:[%s233 + $0x7] sm:$0x1] 0.0
          %248 = vst [vmem:[%s233 + $0x8] sm:$0x1] 0.0
          %249 = vst [vmem:[%s233 + $0x9] sm:$0x1] 0.0
          %250 = vst [vmem:[%s233 + $0xa] sm:$0x1] 0.0
          %251 = vst [vmem:[%s233 + $0xb] sm:$0x1] 0.0
        $region40: #{tpu_custom_call.1} parent=27 // pred_fallthru
          _
        %v252 = vld [vmem:[%s207] sm:$0x3]
        %v253 = vld [vmem:[%s197] sm:$0x3]
        %vm254 = vcmp.gt.f32.partialorder %v253, 0.5
        %v255 = vsel %vm254, 1, 0
        %v256 = vcvt.s32.f32 %v255
        %vm257 = vcmp.eq.s32.totalorder %v252, 0
        %v258 = vsel %vm257, 1, 0
        %v259 = vcvt.s32.f32 %v258
        %v260 = vld [vmem:[%s233] sm:$0x1]
        %v261 = vmul.f32 %v256, %v259
        %vm262 = vcmask 1041408
        %v263 = vsel %vm262, %v261, 0.0
        %v264 = vrot.slane %v263, 4
        %v265 = vadd.f32 %v263, %v264
        %v266 = vrot.slane %v265, 2
        %v267 = vadd.f32 %v265, %v266
        %v268 = vrot.slane %v267, 1
        %v269 = vadd.f32 %v267, %v268
        %v270 = vadd.f32 %v260, %v269
        %271 = vst [vmem:[%s233] sm:$0x1] %v270
        %s272 = scalar_lea.vmem %s233, 1 [#allocation7]
        %v273 = vld [vmem:[%s272] sm:$0x1]
        %v274 = vsel %vm262, %v256, 0.0
        %v275 = vrot.slane %v274, 4
        %v276 = vadd.f32 %v274, %v275
        %v277 = vrot.slane %v276, 2
        %v278 = vadd.f32 %v276, %v277
        %v279 = vrot.slane %v278, 1
        %v280 = vadd.f32 %v278, %v279
        %v281 = vadd.f32 %v273, %v280
        %282 = vst [vmem:[%s272] sm:$0x1] %v281
        %s283 = scalar_lea.vmem %s233, 2 [#allocation7]
        %v284 = vld [vmem:[%s283] sm:$0x1]
        %v285 = vsel %vm262, %v259, 0.0
        %v286 = vrot.slane %v285, 4
        %v287 = vadd.f32 %v285, %v286
        %v288 = vrot.slane %v287, 2
        %v289 = vadd.f32 %v287, %v288
        %v290 = vrot.slane %v289, 1
        %v291 = vadd.f32 %v289, %v290
        %v292 = vadd.f32 %v284, %v291
        %293 = vst [vmem:[%s283] sm:$0x1] %v292
        %s294 = scalar_lea.vmem %s197, 2 [#allocation2]
        %v295 = vld [vmem:[%s294] sm:$0x3]
        %vm296 = vcmp.gt.f32.partialorder %v295, 0.5
        %v297 = vsel %vm296, 1, 0
        %v298 = vcvt.s32.f32 %v297
        %vm299 = vcmp.eq.s32.totalorder %v252, 1
        %v300 = vsel %vm299, 1, 0
        %v301 = vcvt.s32.f32 %v300
        %s302 = scalar_lea.vmem %s233, 3 [#allocation7]
        %v303 = vld [vmem:[%s302] sm:$0x1]
        %v304 = vmul.f32 %v298, %v301
        %v305 = vsel %vm262, %v304, 0.0
        %v306 = vrot.slane %v305, 4
        %v307 = vadd.f32 %v305, %v306
        %v308 = vrot.slane %v307, 2
        %v309 = vadd.f32 %v307, %v308
        %v310 = vrot.slane %v309, 1
        %v311 = vadd.f32 %v309, %v310
        %v312 = vadd.f32 %v303, %v311
        %313 = vst [vmem:[%s302] sm:$0x1] %v312
        %s314 = scalar_lea.vmem %s233, 4 [#allocation7]
        %v315 = vld [vmem:[%s314] sm:$0x1]
        %v316 = vsel %vm262, %v298, 0.0
        %v317 = vrot.slane %v316, 4
        %v318 = vadd.f32 %v316, %v317
        %v319 = vrot.slane %v318, 2
        %v320 = vadd.f32 %v318, %v319
        %v321 = vrot.slane %v320, 1
        %v322 = vadd.f32 %v320, %v321
        %v323 = vadd.f32 %v315, %v322
        %324 = vst [vmem:[%s314] sm:$0x1] %v323
        %s325 = scalar_lea.vmem %s233, 5 [#allocation7]
        %v326 = vld [vmem:[%s325] sm:$0x1]
        %v327 = vsel %vm262, %v301, 0.0
        %v328 = vrot.slane %v327, 4
        %v329 = vadd.f32 %v327, %v328
        %v330 = vrot.slane %v329, 2
        %v331 = vadd.f32 %v329, %v330
        %v332 = vrot.slane %v331, 1
        %v333 = vadd.f32 %v331, %v332
        %v334 = vadd.f32 %v326, %v333
        %335 = vst [vmem:[%s325] sm:$0x1] %v334
        %s336 = scalar_lea.vmem %s197, 4 [#allocation2]
        %v337 = vld [vmem:[%s336] sm:$0x3]
        %vm338 = vcmp.gt.f32.partialorder %v337, 0.5
        %v339 = vsel %vm338, 1, 0
        %v340 = vcvt.s32.f32 %v339
        %vm341 = vcmp.eq.s32.totalorder %v252, 2
        %v342 = vsel %vm341, 1, 0
        %v343 = vcvt.s32.f32 %v342
        %s344 = scalar_lea.vmem %s233, 6 [#allocation7]
        %v345 = vld [vmem:[%s344] sm:$0x1]
        %v346 = vmul.f32 %v340, %v343
        %v347 = vsel %vm262, %v346, 0.0
        %v348 = vrot.slane %v347, 4
        %v349 = vadd.f32 %v347, %v348
        %v350 = vrot.slane %v349, 2
        %v351 = vadd.f32 %v349, %v350
        %v352 = vrot.slane %v351, 1
        %v353 = vadd.f32 %v351, %v352
        %v354 = vadd.f32 %v345, %v353
        %355 = vst [vmem:[%s344] sm:$0x1] %v354
        %s356 = scalar_lea.vmem %s233, 7 [#allocation7]
        %v357 = vld [vmem:[%s356] sm:$0x1]
        %v358 = vsel %vm262, %v340, 0.0
        %v359 = vrot.slane %v358, 4
        %v360 = vadd.f32 %v358, %v359
        %v361 = vrot.slane %v360, 2
        %v362 = vadd.f32 %v360, %v361
        %v363 = vrot.slane %v362, 1
        %v364 = vadd.f32 %v362, %v363
        %v365 = vadd.f32 %v357, %v364
        %366 = vst [vmem:[%s356] sm:$0x1] %v365
        %s367 = scalar_lea.vmem %s233, 8 [#allocation7]
        %v368 = vld [vmem:[%s367] sm:$0x1]
        %v369 = vsel %vm262, %v343, 0.0
        %v370 = vrot.slane %v369, 4
        %v371 = vadd.f32 %v369, %v370
        %v372 = vrot.slane %v371, 2
        %v373 = vadd.f32 %v371, %v372
        %v374 = vrot.slane %v373, 1
        %v375 = vadd.f32 %v373, %v374
        %v376 = vadd.f32 %v368, %v375
        %377 = vst [vmem:[%s367] sm:$0x1] %v376
        %s378 = scalar_lea.vmem %s197, 6 [#allocation2]
        %v379 = vld [vmem:[%s378] sm:$0x3]
        %vm380 = vcmp.gt.f32.partialorder %v379, 0.5
        %v381 = vsel %vm380, 1, 0
        %v382 = vcvt.s32.f32 %v381
        %vm383 = vcmp.eq.s32.totalorder %v252, 3
        %v384 = vsel %vm383, 1, 0
        %v385 = vcvt.s32.f32 %v384
        %s386 = scalar_lea.vmem %s233, 9 [#allocation7]
        %v387 = vld [vmem:[%s386] sm:$0x1]
        %v388 = vmul.f32 %v382, %v385
        %v389 = vsel %vm262, %v388, 0.0
        %v390 = vrot.slane %v389, 4
        %v391 = vadd.f32 %v389, %v390
        %v392 = vrot.slane %v391, 2
        %v393 = vadd.f32 %v391, %v392
        %v394 = vrot.slane %v393, 1
        %v395 = vadd.f32 %v393, %v394
        %v396 = vadd.f32 %v387, %v395
        %397 = vst [vmem:[%s386] sm:$0x1] %v396
        %s398 = scalar_lea.vmem %s233, 10 [#allocation7]
        %v399 = vld [vmem:[%s398] sm:$0x1]
        %v400 = vsel %vm262, %v382, 0.0
        %v401 = vrot.slane %v400, 4
        %v402 = vadd.f32 %v400, %v401
        %v403 = vrot.slane %v402, 2
        %v404 = vadd.f32 %v402, %v403
        %v405 = vrot.slane %v404, 1
        %v406 = vadd.f32 %v404, %v405
        %v407 = vadd.f32 %v399, %v406
        %408 = vst [vmem:[%s398] sm:$0x1] %v407
        %s409 = scalar_lea.vmem %s233, 11 [#allocation7]
        %v410 = vld [vmem:[%s409] sm:$0x1]
        %v411 = vsel %vm262, %v385, 0.0
        %v412 = vrot.slane %v411, 4
        %v413 = vadd.f32 %v411, %v412
        %v414 = vrot.slane %v413, 2
        %v415 = vadd.f32 %v413, %v414
        %v416 = vrot.slane %v415, 1
        %v417 = vadd.f32 %v415, %v416
        %v418 = vadd.f32 %v410, %v417
        %419 = vst [vmem:[%s409] sm:$0x1] %v418
        %s420 = sand.u32 %s109, 1
        %s421 = scalar_lea.sflag [#allocation4], %s420
        %s422 = sand.u32 %s109, 1
        %s423 = smul.addr %s422, 12
        %s424 = scalar_lea.vmem [#allocation7], %s423
        // Predicated region
        $region41: #{tpu_custom_call.1} parent=27 // pred_check
          %p425 = pneg %p119
        $region42: #{tpu_custom_call.1} parent=27 // pred_check_branch
          %427 = sbr.rel (%p425) target = $region44
        $region43: #{tpu_custom_call.1} parent=27 // pred_region
          %s428 = smul.u32 12, %s28
          %430 = vsyncadd %s421, 0
          %s431 = smul.addr %s27, 12
          %s432 = sadd.s32 %s428, %s431
          %s433 = scalar_lea.hbm %s2, %s432
          %s434 = sshll.u32 %s424, 4
          %s435 = int_to_ptr.vmem [resolvable:$true] %s434
          %s436 = sshll.u32 %s433, 4
          %s437 = int_to_ptr.hbm [resolvable:$true] %s436
          %442 = dma.vmem_to_hbm [thread:$0]  %s435, 192, %s437, %s421, 16, 16, 1
        $region44: #{tpu_custom_call.1} parent=27 // pred_fallthru
          _
      $region28: #{tpu_custom_call.1} parent=5 // pred_fallthru
        _
      %p443 = scmp.le.s32.totalorder 2, %s17
      // Predicated region
      $region45: #{tpu_custom_call.1} parent=5 // pred_check
        %p444 = pneg %p443
      $region46: #{tpu_custom_call.1} parent=5 // pred_check_branch
        %446 = sbr.rel (%p444) target = $region48
      $region47: #{tpu_custom_call.1} parent=5 // pred_region
        %s447 = ssub.s32 %s17, 2
        // Predicated region
        $region49: #{tpu_custom_call.1} parent=47 // pred_check
          %p448 = pneg %p125
        $region50: #{tpu_custom_call.1} parent=47 // pred_check_branch
          %450 = sbr.rel (%p448) target = $region52
        $region51: #{tpu_custom_call.1} parent=47 // pred_region
          %s451 = sand.u32 %s110, 1
          %s452 = scalar_lea.sflag [#allocation4], %s451
          %s453 = sand.u32 %s110, 1
          %s454 = smul.addr %s453, 12
          %s455 = scalar_lea.vmem [#allocation7], %s454
          %457 = dma.done %s452, 192
        $region52: #{tpu_custom_call.1} parent=47 // pred_fallthru
          _
      $region48: #{tpu_custom_call.1} parent=5 // pred_fallthru
        _
    $region6: #{tpu_custom_call.1} parent=1 // loop_footer
      %s21 = sadd.s32 1, %s17
    $region7: #{tpu_custom_call.1} parent=1 // loop_footer_branch
      %16 = sbr.rel target = $region3
    $region8: #{tpu_custom_call.1} parent=1 // loop_exit
      _
    %458 = vsyncpa [#allocation3], 1
    %s459 = scalar_lea.sflag [#allocation3], 1
    %460 = vsyncpa %s459, 1
    %461 = vsyncpa [#allocation6], 1
    %s462 = scalar_lea.sflag [#allocation6], 1
    %463 = vsyncpa %s462, 1
    %464 = vsyncpa [#allocation4], 1
    %s465 = scalar_lea.sflag [#allocation4], 1
    %466 = vsyncpa %s465, 1

</llo_original>
